<compile_context>
chip_gen: v7x
topology: tpu7x:2x2x1
jax: 0.10.0
libtpu: 0.0.40
codegen_flags: <defaults>
</compile_context>

<pallas_src>
import functools

import jax
import jax.numpy as jnp
from jax.experimental import pallas as pl
from jax.experimental.pallas import tpu as pltpu


def _sum_ct(x):
    """Sum over the (C, T) axes of a (b, C, T) block, keepdims -> (b, 1, 1)."""
    return jnp.sum(jnp.sum(x, axis=2, keepdims=True), axis=1, keepdims=True)


# ---------------------------------------------------------------------------
# Single-pass kernel: one (bB, C, T) slab per grid step.
# ---------------------------------------------------------------------------
def _gcln_single_pass_kernel(x_ref, gamma_ref, beta_ref, o_ref, *, eps, inv_n):
    x = x_ref[...].astype(jnp.float32)                  # (bB, C, T)

    # One traversal: sum and sum-of-squares, f32 accumulation.
    s1 = _sum_ct(x)                                     # (bB, 1, 1)
    s2 = _sum_ct(x * x)                                 # (bB, 1, 1)
    mean = s1 * inv_n
    var = jnp.maximum(s2 * inv_n - mean * mean, 0.0)    # guard f32 cancellation
    inv_std = jax.lax.rsqrt(var + eps)                  # (bB, 1, 1)

    gamma = gamma_ref[...].astype(jnp.float32)[None]    # (1, C, 1)
    beta = beta_ref[...].astype(jnp.float32)[None]      # (1, C, 1)

    # Fold normalization into a per-channel affine: out = x * scale + shift.
    scale = gamma * inv_std                             # (bB, C, 1)
    shift = beta - mean * scale                         # (bB, C, 1)
    o_ref[...] = (x * scale + shift).astype(o_ref.dtype)


# ---------------------------------------------------------------------------
# Two-phase path (large C*T): phase 1 = stats -> per-channel scale/shift.
# ---------------------------------------------------------------------------
def _gcln_stats_kernel(x_ref, gamma_ref, beta_ref, scale_ref, shift_ref,
                       s1_ref, s2_ref, *, eps, inv_n):
    t = pl.program_id(1)

    @pl.when(t == 0)
    def _():
        s1_ref[...] = jnp.zeros_like(s1_ref)
        s2_ref[...] = jnp.zeros_like(s2_ref)

    x = x_ref[...].astype(jnp.float32)                  # (1, C, tT)
    s1_ref[...] += _sum_ct(x)[0]                        # (1, 1)
    s2_ref[...] += _sum_ct(x * x)[0]                    # (1, 1)

    @pl.when(t == pl.num_programs(1) - 1)
    def _():
        mean = s1_ref[...] * inv_n                      # (1, 1)
        var = jnp.maximum(s2_ref[...] * inv_n - mean * mean, 0.0)
        inv_std = jax.lax.rsqrt(var + eps)              # (1, 1)
        gamma = gamma_ref[...].astype(jnp.float32)      # (C, 1)
        beta = beta_ref[...].astype(jnp.float32)        # (C, 1)
        scale = gamma * inv_std                         # (C, 1)
        shift = beta - mean * scale                     # (C, 1)
        scale_ref[...] = scale[None].astype(scale_ref.dtype)   # (1, C, 1)
        shift_ref[...] = shift[None].astype(shift_ref.dtype)


# Phase 2 = apply per-channel affine to each (1, C, tT) tile.
def _gcln_apply_kernel(x_ref, scale_ref, shift_ref, o_ref):
    x = x_ref[...].astype(jnp.float32)                  # (1, C, tT)
    scale = scale_ref[...].astype(jnp.float32)          # (1, C, 1)
    shift = shift_ref[...].astype(jnp.float32)          # (1, C, 1)
    o_ref[...] = (x * scale + shift).astype(o_ref.dtype)


# ---------------------------------------------------------------------------
# Wrappers
# ---------------------------------------------------------------------------
def _vmem_capacity_bytes():
    try:
        return int(pltpu.get_tpu_info().vmem_capacity_bytes)
    except Exception:
        return 64 * 1024 * 1024  # conservative: v7x physical VMEM


def _largest_batch_block(B, per_batch_bytes, budget):
    best = 1
    for d in range(1, B + 1):
        if B % d == 0 and d * per_batch_bytes <= budget:
            best = d
    return best


def _pick_time_tile(T, C, budget):
    """Largest multiple-of-128 divisor of T whose in+out double-buffered f32
    footprint (16*C*tT bytes) fits the budget; None if no such divisor."""
    best = None
    d = 128
    while d <= T:
        if T % d == 0 and 16 * C * d <= budget:
            best = d
        d += 128
    return best


def _gcln_single_pass(x, gamma, beta, eps, budget, capacity):
    B, C, T = x.shape
    bB = _largest_batch_block(B, 16 * C * T, max(budget, 16 * C * T))
    grid = (B // bB,)
    inv_n = 1.0 / float(C * T)

    resident = 16 * bB * C * T + 32 * C         # in/out double-buffered + params
    vmem_limit = int(max(32 * 1024 * 1024,
                         min(capacity * 3 // 4, resident + (8 << 20))))

    kernel = functools.partial(_gcln_single_pass_kernel, eps=eps, inv_n=inv_n)
    return pl.pallas_call(
        kernel,
        out_shape=jax.ShapeDtypeStruct((B, C, T), x.dtype),
        grid=grid,
        in_specs=[
            pl.BlockSpec((bB, C, T), lambda b: (b, 0, 0)),
            pl.BlockSpec((C, 1), lambda b: (0, 0)),
            pl.BlockSpec((C, 1), lambda b: (0, 0)),
        ],
        out_specs=pl.BlockSpec((bB, C, T), lambda b: (b, 0, 0)),
        compiler_params=pltpu.CompilerParams(
            dimension_semantics=("parallel",),
            vmem_limit_bytes=vmem_limit,
        ),
        cost_estimate=pl.CostEstimate(
            flops=6 * B * C * T,
            transcendentals=B,
            bytes_accessed=2 * B * C * T * x.dtype.itemsize + 8 * C,
        ),
    )(x, gamma, beta)


def _gcln_two_phase(x, gamma, beta, eps, t_tile):
    B, C, T = x.shape
    nT = T // t_tile
    inv_n = 1.0 / float(C * T)

    stats_kernel = functools.partial(_gcln_stats_kernel, eps=eps, inv_n=inv_n)
    scale, shift = pl.pallas_call(
        stats_kernel,
        out_shape=(
            jax.ShapeDtypeStruct((B, C, 1), jnp.float32),
            jax.ShapeDtypeStruct((B, C, 1), jnp.float32),
        ),
        grid=(B, nT),
        in_specs=[
            pl.BlockSpec((1, C, t_tile), lambda b, t: (b, 0, t)),
            pl.BlockSpec((C, 1), lambda b, t: (0, 0)),
            pl.BlockSpec((C, 1), lambda b, t: (0, 0)),
        ],
        out_specs=(
            pl.BlockSpec((1, C, 1), lambda b, t: (b, 0, 0)),
            pl.BlockSpec((1, C, 1), lambda b, t: (b, 0, 0)),
        ),
        scratch_shapes=[
            pltpu.VMEM((1, 1), jnp.float32),
            pltpu.VMEM((1, 1), jnp.float32),
        ],
        compiler_params=pltpu.CompilerParams(
            dimension_semantics=("parallel", "arbitrary"),
        ),
        cost_estimate=pl.CostEstimate(
            flops=3 * B * C * T,
            transcendentals=B,
            bytes_accessed=B * C * T * x.dtype.itemsize,
        ),
    )(x, gamma, beta)

    return pl.pallas_call(
        _gcln_apply_kernel,
        out_shape=jax.ShapeDtypeStruct((B, C, T), x.dtype),
        grid=(B, nT),
        in_specs=[
            pl.BlockSpec((1, C, t_tile), lambda b, t: (b, 0, t)),
            pl.BlockSpec((1, C, 1), lambda b, t: (b, 0, 0)),
            pl.BlockSpec((1, C, 1), lambda b, t: (b, 0, 0)),
        ],
        out_specs=pl.BlockSpec((1, C, t_tile), lambda b, t: (b, 0, t)),
        compiler_params=pltpu.CompilerParams(
            dimension_semantics=("parallel", "parallel"),
        ),
        cost_estimate=pl.CostEstimate(
            flops=2 * B * C * T,
            transcendentals=0,
            bytes_accessed=2 * B * C * T * x.dtype.itemsize,
        ),
    )(x, scale, shift)


def global_channel_layer_norm(x, gamma, beta, eps=1e-7, *, vmem_budget_bytes=None):
    """x: (B, C, T); gamma, beta: (C, 1). Matches GlobalChannelLayerNorm.forward."""
    B, C, T = x.shape
    assert gamma.shape == (C, 1) and beta.shape == (C, 1)

    capacity = _vmem_capacity_bytes()
    budget = int(vmem_budget_bytes) if vmem_budget_bytes is not None else capacity // 2

    per_batch_resident = 16 * C * T  # in + out, double-buffered, f32
    if per_batch_resident <= budget:
        return _gcln_single_pass(x, gamma, beta, eps, budget, capacity)

    t_tile = _pick_time_tile(T, C, budget)
    if t_tile is None:
        # TODO(synk): mask-based T tiling for huge T not divisible by 128;
        # fall back to the single-pass kernel with a raised VMEM limit.
        return _gcln_single_pass(x, gamma, beta, eps, budget, capacity)
    return _gcln_two_phase(x, gamma, beta, eps, t_tile)


def reference(x, gamma, beta, eps=1e-7):
    mean = jnp.mean(x, axis=(1, 2), keepdims=True)
    var = jnp.mean((x - mean) ** 2, axis=(1, 2), keepdims=True)
    return gamma[None] * (x - mean) / jnp.sqrt(var + eps) + beta[None]


if __name__ == "__main__":
    key = jax.random.PRNGKey(0)
    k0, k1, k2, k3 = jax.random.split(key, 4)

    # --- Case 1: module-consistent small shapes (single-pass path). ---
    B, C, T = 2, 4, 16
    x = jax.random.normal(k0, (B, C, T), dtype=jnp.float32)
    # nn.Parameter defaults: gamma = ones(dim, 1), beta = zeros(dim, 1).
    gamma = jnp.ones((C, 1), dtype=jnp.float32)
    beta = jnp.zeros((C, 1), dtype=jnp.float32)

    out = jax.block_until_ready(global_channel_layer_norm(x, gamma, beta))
    ref = reference(x, gamma, beta)
    assert out.shape == (B, C, T)
    assert jnp.allclose(out, ref, atol=1e-5, rtol=1e-5), "single-pass mismatch"

    # --- Case 2: force the T-tiled two-phase path (large-slab / v7x fallback). ---
    B2, C2, T2 = 2, 8, 256
    x2 = jax.random.normal(k1, (B2, C2, T2), dtype=jnp.float32)
    gamma2 = 1.0 + 0.1 * jax.random.normal(k2, (C2, 1), dtype=jnp.float32)
    beta2 = 0.1 * jax.random.normal(k3, (C2, 1), dtype=jnp.float32)
    out2 = jax.block_until_ready(
        global_channel_layer_norm(x2, gamma2, beta2, vmem_budget_bytes=24 * 1024))
    ref2 = reference(x2, gamma2, beta2)
    assert out2.shape == (B2, C2, T2)
    assert jnp.allclose(out2, ref2, atol=1e-5, rtol=1e-5), "two-phase mismatch"

    print("KERNEL_OK")
</pallas_src>

<mosaic_0001>
module attributes {stable_mosaic.version = 11 : i64} {
  func.func @_gcln_single_pass_kernel(%arg0: i32, %arg1: memref<2x4x16xf32, #tpu.memory_space<vmem>>, %arg2: memref<4x1xf32, #tpu.memory_space<vmem>>, %arg3: memref<4x1xf32, #tpu.memory_space<vmem>>, %arg4: memref<2x4x16xf32, #tpu.memory_space<vmem>>) attributes {dimension_semantics = [#tpu.dimension_semantics<parallel>], iteration_bounds = array<i64: 1>, scalar_prefetch = 0 : i64, scratch_operands = 0 : i64, tpu.core_type = #tpu.core_type<tc>, window_params = [{transform_indices = @transform_0, window_bounds = array<i64: 2, 4, 16>}, {pipeline_mode = #tpu.pipeline_mode<synchronous>, transform_indices = @transform_1, window_bounds = array<i64: 4, 1>}, {pipeline_mode = #tpu.pipeline_mode<synchronous>, transform_indices = @transform_2, window_bounds = array<i64: 4, 1>}, {transform_indices = @transform_3, window_bounds = array<i64: 2, 4, 16>}]} {
    %c0 = arith.constant 0 : index
    %c0_0 = arith.constant 0 : index
    %c0_1 = arith.constant 0 : index
    %0 = vector.load %arg1[%c0, %c0_0, %c0_1] : memref<2x4x16xf32, #tpu.memory_space<vmem>>, vector<2x4x16xf32>
    %cst = arith.constant dense<0.000000e+00> : vector<2x4xf32>
    %1 = vector.multi_reduction <add>, %0, %cst [2] : vector<2x4x16xf32> to vector<2x4xf32>
    %2 = vector.shape_cast %1 : vector<2x4xf32> to vector<2x4x1xf32>
    %cst_2 = arith.constant dense<0.000000e+00> : vector<2x1xf32>
    %3 = vector.multi_reduction <add>, %2, %cst_2 [1] : vector<2x4x1xf32> to vector<2x1xf32>
    %4 = vector.shape_cast %3 : vector<2x1xf32> to vector<2x1x1xf32>
    %5 = arith.mulf %0, %0 : vector<2x4x16xf32>
    %cst_3 = arith.constant dense<0.000000e+00> : vector<2x4xf32>
    %6 = vector.multi_reduction <add>, %5, %cst_3 [2] : vector<2x4x16xf32> to vector<2x4xf32>
    %7 = vector.shape_cast %6 : vector<2x4xf32> to vector<2x4x1xf32>
    %cst_4 = arith.constant dense<0.000000e+00> : vector<2x1xf32>
    %8 = vector.multi_reduction <add>, %7, %cst_4 [1] : vector<2x4x1xf32> to vector<2x1xf32>
    %9 = vector.shape_cast %8 : vector<2x1xf32> to vector<2x1x1xf32>
    %cst_5 = arith.constant 1.562500e-02 : f32
    %10 = vector.broadcast %cst_5 : f32 to vector<2x1x1xf32>
    %11 = arith.mulf %4, %10 : vector<2x1x1xf32>
    %cst_6 = arith.constant 1.562500e-02 : f32
    %12 = vector.broadcast %cst_6 : f32 to vector<2x1x1xf32>
    %13 = arith.mulf %9, %12 : vector<2x1x1xf32>
    %14 = arith.mulf %11, %11 : vector<2x1x1xf32>
    %15 = arith.subf %13, %14 : vector<2x1x1xf32>
    %cst_7 = arith.constant 0.000000e+00 : f32
    %16 = vector.broadcast %cst_7 : f32 to vector<2x1x1xf32>
    %17 = arith.maximumf %15, %16 : vector<2x1x1xf32>
    %cst_8 = arith.constant 1.000000e-07 : f32
    %18 = vector.broadcast %cst_8 : f32 to vector<2x1x1xf32>
    %19 = arith.addf %17, %18 : vector<2x1x1xf32>
    %20 = math.rsqrt %19 : vector<2x1x1xf32>
    %c0_9 = arith.constant 0 : index
    %c0_10 = arith.constant 0 : index
    %21 = vector.load %arg2[%c0_9, %c0_10] : memref<4x1xf32, #tpu.memory_space<vmem>>, vector<4x1xf32>
    %22 = vector.shape_cast %21 : vector<4x1xf32> to vector<1x4x1xf32>
    %c0_11 = arith.constant 0 : index
    %c0_12 = arith.constant 0 : index
    %23 = vector.load %arg3[%c0_11, %c0_12] : memref<4x1xf32, #tpu.memory_space<vmem>>, vector<4x1xf32>
    %24 = vector.shape_cast %23 : vector<4x1xf32> to vector<1x4x1xf32>
    %25 = vector.broadcast %22 : vector<1x4x1xf32> to vector<2x4x1xf32>
    %26 = vector.broadcast %20 : vector<2x1x1xf32> to vector<2x4x1xf32>
    %27 = arith.mulf %25, %26 : vector<2x4x1xf32>
    %28 = vector.broadcast %11 : vector<2x1x1xf32> to vector<2x4x1xf32>
    %29 = arith.mulf %28, %27 : vector<2x4x1xf32>
    %30 = vector.broadcast %24 : vector<1x4x1xf32> to vector<2x4x1xf32>
    %31 = arith.subf %30, %29 : vector<2x4x1xf32>
    %32 = vector.broadcast %27 : vector<2x4x1xf32> to vector<2x4x16xf32>
    %33 = arith.mulf %0, %32 : vector<2x4x16xf32>
    %34 = vector.broadcast %31 : vector<2x4x1xf32> to vector<2x4x16xf32>
    %35 = arith.addf %33, %34 : vector<2x4x16xf32>
    %c0_13 = arith.constant 0 : index
    %c0_14 = arith.constant 0 : index
    %c0_15 = arith.constant 0 : index
    %36 = vector.load %arg4[%c0_13, %c0_14, %c0_15] : memref<2x4x16xf32, #tpu.memory_space<vmem>>, vector<2x4x16xf32>
    tpu.vector_store %arg4[%c0_13, %c0_14, %c0_15], %35 {strides = array<i32>} : memref<2x4x16xf32, #tpu.memory_space<vmem>>, vector<2x4x16xf32>,
    return
  }
  func.func @transform_0(%arg0: i32) -> (i32, i32, i32) {
    %c0_i32 = arith.constant 0 : i32
    %c0_i32_0 = arith.constant 0 : i32
    %c0_i32_1 = arith.constant 0 : i32
    return %arg0, %c0_i32, %c0_i32_0 : i32, i32, i32
  }
  func.func @transform_1(%arg0: i32) -> (i32, i32) {
    %c0_i32 = arith.constant 0 : i32
    %c0_i32_0 = arith.constant 0 : i32
    %c0_i32_1 = arith.constant 0 : i32
    return %c0_i32, %c0_i32_0 : i32, i32
  }
  func.func @transform_2(%arg0: i32) -> (i32, i32) {
    %c0_i32 = arith.constant 0 : i32
    %c0_i32_0 = arith.constant 0 : i32
    %c0_i32_1 = arith.constant 0 : i32
    return %c0_i32, %c0_i32_0 : i32, i32
  }
  func.func @transform_3(%arg0: i32) -> (i32, i32, i32) {
    %c0_i32 = arith.constant 0 : i32
    %c0_i32_0 = arith.constant 0 : i32
    %c0_i32_1 = arith.constant 0 : i32
    return %arg0, %c0_i32, %c0_i32_0 : i32, i32, i32
  }
}

</mosaic_0001>

<llo_original>
// kernel: tpu_custom_call.1
$region0: #{tpu_custom_call.1}
  #allocation0 [shape = 'u32[]', space=smem, size = 0x4, offset = 0x4, fixed_abs, tag = 'smem constant byte address 0x4 - core index']
  #allocation1 [shape = 'u32[144,128]{1,0:T(1,128)}', space=vmem, size = 0x12000, scoped, tag = 'internal scratch']
  %s0 = inlined_call_operand.vmem [shape: f32[2,4,16], index: 0, kind: input, shape index: {}]
  %s1 = inlined_call_operand.vmem [shape: f32[4,1], index: 1, kind: input, shape index: {}]
  %s2 = inlined_call_operand.vmem [shape: f32[4,1], index: 2, kind: input, shape index: {}]
  %s3 = inlined_call_operand.hbm [shape: f32[2,4,16], index: 3, kind: output, shape index: {}]
  %s4 = sld [smem:[#allocation0]]
  $region22: #{tpu_custom_call.1} parent=0
    _
  %s6 = ssub.s32 1, %s4
  %s7 = scalar_select 0, %s6, %s4
  $region1: #{tpu_custom_call.1} parent=0
    #allocation2 [shape = 'u8[4096]{0}', space=vmem, size = 0x1000, scoped, tag = 'output window, operand 0, single buffered']
    #allocation3 [shape = 's32[1]{0}', space=sflag, size = 0x4, scoped, tag = 'scoped memory for tpu_custom_call.1']
    %8 = vsyncpa [#allocation3], 0
    // Predicated region
    $region2: #{tpu_custom_call.1} parent=1 // pred_check
      _
    $region3: #{tpu_custom_call.1} parent=1 // pred_check_branch
      %10 = sbr.rel (0) target = $region5
    $region4: #{tpu_custom_call.1} parent=1 // pred_region
      _
    $region5: #{tpu_custom_call.1} parent=1 // pred_fallthru
      _
    // Predicated region
    $region6: #{tpu_custom_call.1} parent=1 // pred_check
      _
    $region7: #{tpu_custom_call.1} parent=1 // pred_check_branch
      %12 = sbr.rel (0) target = $region9
    $region8: #{tpu_custom_call.1} parent=1 // pred_region
      _
    $region9: #{tpu_custom_call.1} parent=1 // pred_fallthru
      _
    // Predicated region
    $region10: #{tpu_custom_call.1} parent=1 // pred_check
      _
    $region11: #{tpu_custom_call.1} parent=1 // pred_check_branch
      %14 = sbr.rel (0) target = $region13
    $region12: #{tpu_custom_call.1} parent=1 // pred_region
      _
    $region13: #{tpu_custom_call.1} parent=1 // pred_fallthru
      _
    %v15 = vld [vmem:[%s0] sm:$0xf]
    %v16 = vld [vmem:[%s0 + $0x4] sm:$0xf]
    %vm17 = vcmask 125952
    %v18 = vsel %vm17, %v15, 0.0
    %19 = vadd.xlane.f32.xlu0 %v18
    %v20 = vpop.xlane.xlu0 %19
    %v21 = vsel %vm17, %v16, 0.0
    %22 = vadd.xlane.f32.xlu0 %v21
    %v23 = vpop.xlane.xlu0 %22
    %vm24 = vcmask 1043456
    %v25 = vsel %vm24, %v20, 0.0
    %v26 = vrot.slane %v25, 4
    %v27 = vadd.f32 %v25, %v26
    %v28 = vrot.slane %v27, 2
    %v29 = vadd.f32 %v27, %v28
    %v30 = vrot.slane %v29, 1
    %v31 = vadd.f32 %v29, %v30
    %v32 = vsel %vm24, %v23, 0.0
    %v33 = vrot.slane %v32, 4
    %v34 = vadd.f32 %v32, %v33
    %v35 = vrot.slane %v34, 2
    %v36 = vadd.f32 %v34, %v35
    %v37 = vrot.slane %v36, 1
    %v38 = vadd.f32 %v36, %v37
    %v39 = vmul.f32 %v15, %v15
    %v40 = vmul.f32 %v16, %v16
    %v41 = vsel %vm17, %v39, 0.0
    %42 = vadd.xlane.f32.xlu0 %v41
    %v43 = vpop.xlane.xlu0 %42
    %v44 = vsel %vm17, %v40, 0.0
    %45 = vadd.xlane.f32.xlu0 %v44
    %v46 = vpop.xlane.xlu0 %45
    %v47 = vsel %vm24, %v43, 0.0
    %v48 = vrot.slane %v47, 4
    %v49 = vadd.f32 %v47, %v48
    %v50 = vrot.slane %v49, 2
    %v51 = vadd.f32 %v49, %v50
    %v52 = vrot.slane %v51, 1
    %v53 = vadd.f32 %v51, %v52
    %v54 = vsel %vm24, %v46, 0.0
    %v55 = vrot.slane %v54, 4
    %v56 = vadd.f32 %v54, %v55
    %v57 = vrot.slane %v56, 2
    %v58 = vadd.f32 %v56, %v57
    %v59 = vrot.slane %v58, 1
    %v60 = vadd.f32 %v58, %v59
    %v61 = vmul.f32 %v31, 0.015625
    %v62 = vmul.f32 %v38, 0.015625
    %v63 = vmul.f32 %v53, 0.015625
    %v64 = vmul.f32 %v60, 0.015625
    %v65 = vmul.f32 %v61, %v61
    %v66 = vmul.f32 %v62, %v62
    %v67 = vsub.f32 %v63, %v65
    %v68 = vsub.f32 %v64, %v66
    %v69 = vmax.f32 %v67, 0.0
    %v70 = vmax.f32 %v68, 0.0
    %v71 = vadd.f32 %v69, 1e-07
    %v72 = vadd.f32 %v70, 1e-07
    %v73 = vrsqrt.pop %v71
    %v74 = vrsqrt.pop %v72
    %v75 = vld [vmem:[%s1] sm:$0xf]
    %v76 = vld [vmem:[%s2] sm:$0xf]
    %v77 = vmul.f32 %v75, %v73
    %v78 = vmul.f32 %v75, %v74
    %v79 = vmul.f32 %v61, %v77
    %v80 = vmul.f32 %v62, %v78
    %v81 = vsub.f32 %v76, %v79
    %v82 = vsub.f32 %v76, %v80
    %84 = vset.pattern.permute.xlu0 0
    %85 = vperm.xlu0 %84, %v77
    %v86 = vpop.permute.xlu0 %85
    %89 = vset.pattern.permute.xlu0 0
    %90 = vperm.xlu0 %89, %v78
    %v91 = vpop.permute.xlu0 %90
    %v93 = vmul.f32 %v15, %v86
    %v94 = vmul.f32 %v16, %v91
    %96 = vset.pattern.permute.xlu0 0
    %97 = vperm.xlu0 %96, %v81
    %v98 = vpop.permute.xlu0 %97
    %101 = vset.pattern.permute.xlu0 0
    %102 = vperm.xlu0 %101, %v82
    %v103 = vpop.permute.xlu0 %102
    %v105 = vadd.f32 %v93, %v98
    %v106 = vadd.f32 %v94, %v103
    %107 = vst.msk [vmem:[#allocation2] sm:$0xf] %vm17, %v105
    %108 = vst.msk [vmem:[#allocation2 + $0x4] sm:$0xf] %vm17, %v106
    // Predicated region
    $region14: #{tpu_custom_call.1} parent=1 // pred_check
      _
    $region15: #{tpu_custom_call.1} parent=1 // pred_check_branch
      %110 = sbr.rel (0) target = $region17
    $region16: #{tpu_custom_call.1} parent=1 // pred_region
      %s112 = ssub.s32 128, 128
      %113 = vsyncadd [#allocation3], %s112
      %s114 = sshll.u32 [#allocation2], 4
      %s115 = int_to_ptr.vmem [resolvable:$true] %s114
      %120 = dma.vmem_to_hbm [thread:$0]  %s115, 128, %s3, [#allocation3], 64, 64, 4
    $region17: #{tpu_custom_call.1} parent=1 // pred_fallthru
      _
    // Predicated region
    $region18: #{tpu_custom_call.1} parent=1 // pred_check
      _
    $region19: #{tpu_custom_call.1} parent=1 // pred_check_branch
      %122 = sbr.rel (0) target = $region21
    $region20: #{tpu_custom_call.1} parent=1 // pred_region
      %123 = dma.done [#allocation3], 128
    $region21: #{tpu_custom_call.1} parent=1 // pred_fallthru
      _
    %124 = vsyncpa [#allocation3], 1

</llo_original>
